<compile_context>
chip_gen: v6e
topology: v6e:2x2x1
jax: 0.10.0
libtpu: 0.0.40
codegen_flags: <defaults>
</compile_context>

<pallas_src>
import jax
import jax.numpy as jnp
from jax.experimental import pallas as pl
from jax.experimental.pallas import tpu as pltpu

# ---------------- problem sizes (small, consistent with the module) ----------
NUM_ACTION_TYPES = 7
NUM_MOVE_DIRS = 5
NUM_TRANSFER_DIRS = 5
NUM_TRANSFER_AMTS = 5
HEAD_DIMS = (NUM_ACTION_TYPES, NUM_MOVE_DIRS, NUM_TRANSFER_DIRS, NUM_TRANSFER_AMTS)
HEAD_OFFSETS = tuple(sum(HEAD_DIMS[:i]) for i in range(len(HEAD_DIMS)))
NUM_HEADS = len(HEAD_DIMS)
A_TOTAL = sum(HEAD_DIMS)          # 22

CORE_DIM = 32                     # AHP.core_hidden_dim (small synthetic)
HIDDEN = 32                       # AHP.original_128 (small synthetic)
PAD = 32                          # per-head padded logit width (lane segment)
PAD_SHIFT = 5                     # log2(PAD)
L_TOTAL = NUM_HEADS * PAD         # 128 = one full lane tile of fused logits
BATCH = 8

NEG_MASK = -100000000.0           # same constant as the PyTorch module
PAD_NEG = -1e30                   # strictly below NEG_MASK; pad lanes never win


# ----------------------------- Pallas kernel ---------------------------------
def action_head_kernel(core_ref, bits_ref, we_ref, wh_ref, wo_ref, bias_ref,
                       out_ref):
    bm = core_ref.shape[0]
    f32 = jnp.float32
    mm_dtype = core_ref.dtype     # bf16 (or f32) matmul operand dtype

    be = bias_ref[0:1, :HIDDEN]          # [1, 32]        embed bias (f32)
    bh = bias_ref[1:2, :4 * HIDDEN]      # [1, 4*HIDDEN]  fused hidden biases
    bo = bias_ref[2:3, :]                # [1, 128]       fused (padded) output biases

    # x = relu(embed_fc(core_output))        -- bf16 operands, f32 accumulate
    x = jnp.dot(core_ref[...], we_ref[...], preferred_element_type=f32) + be
    x = jnp.maximum(x, 0.0)                                        # [bm, 32] f32

    # all four hidden FCs in one wide matmul
    xh = jnp.dot(x.astype(mm_dtype), wh_ref[...],
                 preferred_element_type=f32) + bh
    xh = jnp.maximum(xh, 0.0)                                      # [bm, 128] f32

    # all four output FCs via one block-diagonal matmul -> padded logits
    logits = jnp.dot(xh.astype(mm_dtype), wo_ref[...],
                     preferred_element_type=f32) + bo               # [bm, 128] f32

    # ---- expand the bit-packed availability mask in-kernel (review opt 1) ----
    col = jax.lax.broadcasted_iota(jnp.int32, (1, L_TOTAL), 1)      # [1, 128]
    h_idx = col >> PAD_SHIFT                                        # head id 0..3
    s_idx = col & (PAD - 1)                                         # in-segment 0..31
    off = jnp.zeros_like(col)
    dim = jnp.zeros_like(col)
    for i in range(NUM_HEADS):                                      # static unroll
        off = jnp.where(h_idx == i, HEAD_OFFSETS[i], off)
        dim = jnp.where(h_idx == i, HEAD_DIMS[i], dim)
    bit_idx = off + s_idx                                           # flat action bit
    lane_valid = s_idx < dim                                        # non-pad lanes

    bits = bits_ref[...]                                            # [bm, 1] int32
    avail = (jnp.right_shift(bits, bit_idx) & 1) > 0                # [bm, 128] bool
    logits = jnp.where(jnp.logical_and(avail, lane_valid), logits, NEG_MASK)
    logits = jnp.where(lane_valid, logits, PAD_NEG)   # pads: exp underflows to 0

    # ---- per-head argmax / log_prob / entropy (online over 32-lane segments) --
    seg_iota = s_idx[:, :PAD]                                       # [1, 32] = 0..31
    logp_acc = jnp.zeros((bm, 1), f32)
    ent_acc = jnp.zeros((bm, 1), f32)
    idx_cols = []
    for h in range(NUM_HEADS):
        l = logits[:, h * PAD:(h + 1) * PAD]                        # static slice
        m = jnp.max(l, axis=-1, keepdims=True)                      # [bm, 1]
        # deterministic action = first occurrence of the max (== argmax)
        idx = jnp.min(jnp.where(l == m, seg_iota, PAD), axis=-1, keepdims=True)
        e = jnp.exp(l - m)                          # pads/masked underflow to 0
        ssum = jnp.sum(e, axis=-1, keepdims=True)
        lse = m + jnp.log(ssum)
        logp_acc = logp_acc + (m - lse)             # log_prob at the argmax index
        # entropy = -sum p*logp, p = e/ssum ; pad lanes contribute exactly 0
        ent_acc = ent_acc - jnp.sum(e * (l - lse), axis=-1, keepdims=True) / ssum
        idx_cols.append(idx.astype(f32))

    # single output store: [logp | ent | idx0..idx3 | pad pad]  (32 B/row)
    out_ref[...] = jnp.concatenate(
        [logp_acc, ent_acc] + idx_cols + [jnp.zeros((bm, 2), f32)], axis=1)


# ------------------- one-time parameter fusion (review opt 2) -----------------
def prepare_action_head_params(params, matmul_dtype=jnp.bfloat16):
    """Fuse the per-head FCs once; call when params change, NOT per forward."""
    (we, be, w1, b1, w2, b2, w3, b3, w4, b4,
     wo1, bo1, wo2, bo2, wo3, bo3, wo4, bo4) = params
    f32 = jnp.float32

    # four hidden FCs -> one [HIDDEN, 4*HIDDEN] matmul
    wh = jnp.concatenate([w1, w2, w3, w4], axis=1)
    bh = jnp.concatenate([b1, b2, b3, b4], axis=1)

    # four output FCs -> one block-diagonal [4*HIDDEN, L_TOTAL] matmul
    wo = jnp.zeros((NUM_HEADS * HIDDEN, L_TOTAL), f32)
    bo = jnp.zeros((1, L_TOTAL), f32)
    for i, (wo_i, bo_i) in enumerate([(wo1, bo1), (wo2, bo2), (wo3, bo3), (wo4, bo4)]):
        n = HEAD_DIMS[i]
        wo = wo.at[i * HIDDEN:(i + 1) * HIDDEN, i * PAD:i * PAD + n].set(wo_i)
        bo = bo.at[:, i * PAD:i * PAD + n].set(bo_i)

    # pack all biases into one f32 [8, 128] array (rows 0/1/2 = be/bh/bo)
    bias_pack = jnp.zeros((8, L_TOTAL), f32)
    bias_pack = bias_pack.at[0, :HIDDEN].set(be[0])
    bias_pack = bias_pack.at[1, :4 * HIDDEN].set(bh[0])
    bias_pack = bias_pack.at[2, :].set(bo[0])

    return (we.astype(matmul_dtype), wh.astype(matmul_dtype),
            wo.astype(matmul_dtype), bias_pack)


# ------------------------------ per-call wrapper -------------------------------
def action_head_pallas(core_output, available_actions, fused_params):
    we, wh, wo, bias_pack = fused_params
    mm_dtype = we.dtype
    f32 = jnp.float32
    B = core_output.shape[0]

    # bit-pack the 22-wide availability mask: 4 B/row HBM stream (review opt 1)
    aa = available_actions.astype(f32)
    lane_w = jnp.left_shift(jnp.int32(1), jnp.arange(A_TOTAL, dtype=jnp.int32))
    bits = jnp.sum((aa > 0.5).astype(jnp.int32) * lane_w[None, :], axis=1,
                   dtype=jnp.int32)[:, None]                          # [B, 1]

    core_p = core_output.astype(mm_dtype)                             # bf16 core

    # batch tiling (review opts 3 & 4): large tiles for DMA efficiency; for
    # batches > 256 split into >= 2 roughly even steps so v7x dual-TC balances.
    def _ru(x, m):
        return ((x + m - 1) // m) * m
    b_pad8 = _ru(B, 8)
    if b_pad8 <= 256:
        BM = b_pad8
    else:
        nsteps = max(2, -(-b_pad8 // 1024))          # cap tiles at ~1024 rows
        BM = _ru(-(-b_pad8 // nsteps), 8)
    Bp = _ru(b_pad8, BM)
    if Bp != B:
        core_p = jnp.pad(core_p, ((0, Bp - B), (0, 0)))
        bits = jnp.pad(bits, ((0, Bp - B), (0, 0)))
    grid = (Bp // BM,)

    itemsize = jnp.dtype(mm_dtype).itemsize
    w_elems = CORE_DIM * HIDDEN + HIDDEN * 4 * HIDDEN + NUM_HEADS * HIDDEN * L_TOTAL
    flops = 2 * Bp * w_elems
    transc = Bp * (L_TOTAL + NUM_HEADS)                               # exp + log
    bytes_acc = (Bp * CORE_DIM * itemsize + Bp * 4 + w_elems * itemsize
                 + 8 * L_TOTAL * 4 + Bp * 8 * 4)

    out = pl.pallas_call(
        action_head_kernel,
        out_shape=jax.ShapeDtypeStruct((Bp, 8), f32),
        grid_spec=pltpu.PrefetchScalarGridSpec(
            num_scalar_prefetch=0,
            grid=grid,
            in_specs=[
                pl.BlockSpec((BM, CORE_DIM), lambda i: (i, 0)),
                pl.BlockSpec((BM, 1), lambda i: (i, 0)),
                pl.BlockSpec((CORE_DIM, HIDDEN), lambda i: (0, 0)),
                pl.BlockSpec((HIDDEN, 4 * HIDDEN), lambda i: (0, 0)),
                pl.BlockSpec((NUM_HEADS * HIDDEN, L_TOTAL), lambda i: (0, 0)),
                pl.BlockSpec((8, L_TOTAL), lambda i: (0, 0)),
            ],
            out_specs=pl.BlockSpec((BM, 8), lambda i: (i, 0)),
        ),
        compiler_params=pltpu.CompilerParams(
            dimension_semantics=("parallel",)),
        cost_estimate=pl.CostEstimate(
            flops=flops, transcendentals=transc, bytes_accessed=bytes_acc),
    )(core_p, bits, we, wh, wo, bias_pack)

    logp = out[:B, 0]
    ent = out[:B, 1]
    act = out[:B, 2:6].astype(jnp.int32)   # indices 0..31 are exact in f32
    return logp, ent, act


# ------------------------- pure-JAX reference ---------------------------------
def action_head_ref(core_output, available_actions, params,
                    matmul_dtype=jnp.float32):
    (we, be, w1, b1, w2, b2, w3, b3, w4, b4,
     wo1, bo1, wo2, bo2, wo3, bo3, wo4, bo4) = params

    def mm(a, w):  # emulate the kernel's operand dtype, f32 accumulate
        return jnp.dot(a.astype(matmul_dtype), w.astype(matmul_dtype),
                       preferred_element_type=jnp.float32)

    x = jax.nn.relu(mm(core_output, we) + be)
    heads = [(w1, b1, wo1, bo1), (w2, b2, wo2, bo2),
             (w3, b3, wo3, bo3), (w4, b4, wo4, bo4)]
    total_logp = 0.0
    total_ent = 0.0
    acts = []
    off = 0
    for i, (whd, bhd, woh, boh) in enumerate(heads):
        n = HEAD_DIMS[i]
        xh = jax.nn.relu(mm(x, whd) + bhd)
        logits = mm(xh, woh) + boh
        mask = available_actions[:, off:off + n] > 0.5
        logits = jnp.where(mask, logits, NEG_MASK)
        a = jnp.argmax(logits, axis=-1)
        logp = jax.nn.log_softmax(logits, axis=-1)
        p = jnp.exp(logp)
        total_logp = total_logp + jnp.take_along_axis(logp, a[:, None], axis=1)[:, 0]
        total_ent = total_ent - jnp.sum(p * logp, axis=-1)
        acts.append(a.astype(jnp.int32))
        off += n
    return total_logp, total_ent, jnp.stack(acts, axis=1)


# --------------------------------- main ----------------------------------------
if __name__ == "__main__":
    key = jax.random.PRNGKey(0)
    keys = jax.random.split(key, 24)

    def lin(kw, kb, din, dout):
        w = jax.random.normal(kw, (din, dout), jnp.float32) * 0.1
        bb = jax.random.normal(kb, (1, dout), jnp.float32) * 0.1
        return w, bb

    we, be = lin(keys[0], keys[1], CORE_DIM, HIDDEN)
    w1, b1 = lin(keys[2], keys[3], HIDDEN, HIDDEN)
    w2, b2 = lin(keys[4], keys[5], HIDDEN, HIDDEN)
    w3, b3 = lin(keys[6], keys[7], HIDDEN, HIDDEN)
    w4, b4 = lin(keys[8], keys[9], HIDDEN, HIDDEN)
    wo1, bo1 = lin(keys[10], keys[11], HIDDEN, NUM_ACTION_TYPES)
    wo2, bo2 = lin(keys[12], keys[13], HIDDEN, NUM_MOVE_DIRS)
    wo3, bo3 = lin(keys[14], keys[15], HIDDEN, NUM_TRANSFER_DIRS)
    wo4, bo4 = lin(keys[16], keys[17], HIDDEN, NUM_TRANSFER_AMTS)

    params = (we, be, w1, b1, w2, b2, w3, b3, w4, b4,
              wo1, bo1, wo2, bo2, wo3, bo3, wo4, bo4)

    core_output = jax.random.normal(keys[18], (BATCH, CORE_DIM), jnp.float32)

    # availability mask: random, but force first option of each head available
    avail = (jax.random.uniform(keys[19], (BATCH, A_TOTAL)) < 0.7).astype(jnp.float32)
    off = 0
    for n in HEAD_DIMS:
        avail = avail.at[:, off].set(1.0)
        off += n

    # one-time fusion (review opt 2); bf16 matmul operands (review opt 5)
    fused = prepare_action_head_params(params, matmul_dtype=jnp.bfloat16)

    logp, ent, act = action_head_pallas(core_output, avail, fused)
    jax.block_until_ready((logp, ent, act))

    # tight check vs reference that uses the same bf16 operand rounding
    logp_r, ent_r, act_r = action_head_ref(core_output, avail, params,
                                           matmul_dtype=jnp.bfloat16)
    assert jnp.allclose(logp, logp_r, atol=1e-3, rtol=1e-3), (logp, logp_r)
    assert jnp.allclose(ent, ent_r, atol=1e-3, rtol=1e-3), (ent, ent_r)
    assert jnp.array_equal(act, act_r), (act, act_r)

    # loose check vs the full-f32 reference (PyTorch module semantics)
    logp_f, ent_f, _ = action_head_ref(core_output, avail, params,
                                       matmul_dtype=jnp.float32)
    assert jnp.allclose(logp, logp_f, atol=5e-2), (logp, logp_f)
    assert jnp.allclose(ent, ent_f, atol=5e-2), (ent, ent_f)

    print("KERNEL_OK")
</pallas_src>

<mosaic_0001>
module attributes {stable_mosaic.version = 11 : i64} {
  func.func @action_head_kernel(%arg0: i32, %arg1: memref<8x32xbf16, #tpu.memory_space<vmem>>, %arg2: memref<8x1xi32, #tpu.memory_space<vmem>>, %arg3: memref<32x32xbf16, #tpu.memory_space<vmem>>, %arg4: memref<32x128xbf16, #tpu.memory_space<vmem>>, %arg5: memref<128x128xbf16, #tpu.memory_space<vmem>>, %arg6: memref<8x128xf32, #tpu.memory_space<vmem>>, %arg7: memref<8x8xf32, #tpu.memory_space<vmem>>) attributes {dimension_semantics = [#tpu.dimension_semantics<parallel>], iteration_bounds = array<i64: 1>, scalar_prefetch = 0 : i64, scratch_operands = 0 : i64, tpu.core_type = #tpu.core_type<tc>, window_params = [{transform_indices = @transform_0, window_bounds = array<i64: 8, 32>}, {transform_indices = @transform_1, window_bounds = array<i64: 8, 1>}, {pipeline_mode = #tpu.pipeline_mode<synchronous>, transform_indices = @transform_2, window_bounds = array<i64: 32, 32>}, {pipeline_mode = #tpu.pipeline_mode<synchronous>, transform_indices = @transform_3, window_bounds = array<i64: 32, 128>}, {pipeline_mode = #tpu.pipeline_mode<synchronous>, transform_indices = @transform_4, window_bounds = array<i64: 128, 128>}, {pipeline_mode = #tpu.pipeline_mode<synchronous>, transform_indices = @transform_5, window_bounds = array<i64: 8, 128>}, {transform_indices = @transform_6, window_bounds = array<i64: 8, 8>}]} {
    %c0 = arith.constant 0 : index
    %c0_0 = arith.constant 0 : index
    %0 = vector.load %arg6[%c0, %c0_0] : memref<8x128xf32, #tpu.memory_space<vmem>>, vector<1x32xf32>
    %c1 = arith.constant 1 : index
    %c0_1 = arith.constant 0 : index
    %1 = vector.load %arg6[%c1, %c0_1] : memref<8x128xf32, #tpu.memory_space<vmem>>, vector<1x128xf32>
    %c2 = arith.constant 2 : index
    %c0_2 = arith.constant 0 : index
    %2 = vector.load %arg6[%c2, %c0_2] : memref<8x128xf32, #tpu.memory_space<vmem>>, vector<1x128xf32>
    %c0_3 = arith.constant 0 : index
    %c0_4 = arith.constant 0 : index
    %3 = vector.load %arg1[%c0_3, %c0_4] : memref<8x32xbf16, #tpu.memory_space<vmem>>, vector<8x32xbf16>
    %c0_5 = arith.constant 0 : index
    %c0_6 = arith.constant 0 : index
    %4 = vector.load %arg3[%c0_5, %c0_6] : memref<32x32xbf16, #tpu.memory_space<vmem>>, vector<32x32xbf16>
    %cst = arith.constant dense<0.000000e+00> : vector<8x32xf32>
    %5 = tpu.matmul %3, %4, %cst {dimension_numbers = #tpu.dot_dimension_numbers<[1], [0], [0], [1], [0, 0, 1, 1], [], []>} : vector<8x32xbf16>, vector<32x32xbf16>, vector<8x32xf32> -> vector<8x32xf32>
    %6 = vector.broadcast %0 : vector<1x32xf32> to vector<8x32xf32>
    %7 = arith.addf %5, %6 : vector<8x32xf32>
    %cst_7 = arith.constant 0.000000e+00 : f32
    %8 = vector.broadcast %cst_7 : f32 to vector<8x32xf32>
    %9 = arith.maximumf %7, %8 : vector<8x32xf32>
    %10 = arith.truncf %9 : vector<8x32xf32> to vector<8x32xbf16>
    %c0_8 = arith.constant 0 : index
    %c0_9 = arith.constant 0 : index
    %11 = vector.load %arg4[%c0_8, %c0_9] : memref<32x128xbf16, #tpu.memory_space<vmem>>, vector<32x128xbf16>
    %cst_10 = arith.constant dense<0.000000e+00> : vector<8x128xf32>
    %12 = tpu.matmul %10, %11, %cst_10 {dimension_numbers = #tpu.dot_dimension_numbers<[1], [0], [0], [1], [0, 0, 1, 1], [], []>} : vector<8x32xbf16>, vector<32x128xbf16>, vector<8x128xf32> -> vector<8x128xf32>
    %13 = vector.broadcast %1 : vector<1x128xf32> to vector<8x128xf32>
    %14 = arith.addf %12, %13 : vector<8x128xf32>
    %cst_11 = arith.constant 0.000000e+00 : f32
    %15 = vector.broadcast %cst_11 : f32 to vector<8x128xf32>
    %16 = arith.maximumf %14, %15 : vector<8x128xf32>
    %17 = arith.truncf %16 : vector<8x128xf32> to vector<8x128xbf16>
    %c0_12 = arith.constant 0 : index
    %c0_13 = arith.constant 0 : index
    %18 = vector.load %arg5[%c0_12, %c0_13] : memref<128x128xbf16, #tpu.memory_space<vmem>>, vector<128x128xbf16>
    %cst_14 = arith.constant dense<0.000000e+00> : vector<8x128xf32>
    %19 = tpu.matmul %17, %18, %cst_14 {dimension_numbers = #tpu.dot_dimension_numbers<[1], [0], [0], [1], [0, 0, 1, 1], [], []>} : vector<8x128xbf16>, vector<128x128xbf16>, vector<8x128xf32> -> vector<8x128xf32>
    %20 = vector.broadcast %2 : vector<1x128xf32> to vector<8x128xf32>
    %21 = arith.addf %19, %20 : vector<8x128xf32>
    %22 = tpu.iota {dimensions = array<i32: 1>} : vector<1x128xi32>
    %c5_i32 = arith.constant 5 : i32
    %23 = vector.broadcast %c5_i32 : i32 to vector<1x128xi32>
    %24 = arith.shrsi %22, %23 : vector<1x128xi32>
    %c31_i32 = arith.constant 31 : i32
    %25 = vector.broadcast %c31_i32 : i32 to vector<1x128xi32>
    %26 = arith.andi %22, %25 : vector<1x128xi32>
    %c0_i32 = arith.constant 0 : i32
    %27 = vector.broadcast %c0_i32 : i32 to vector<1x128xi32>
    %c0_i32_15 = arith.constant 0 : i32
    %28 = vector.broadcast %c0_i32_15 : i32 to vector<1x128xi32>
    %c0_i32_16 = arith.constant 0 : i32
    %29 = vector.broadcast %c0_i32_16 : i32 to vector<1x128xi32>
    %30 = arith.cmpi eq, %24, %29 : vector<1x128xi32>
    %c0_i32_17 = arith.constant 0 : i32
    %31 = vector.broadcast %c0_i32_17 : i32 to vector<1x128xi32>
    %32 = arith.select %30, %31, %27 : vector<1x128xi1>, vector<1x128xi32>
    %c0_i32_18 = arith.constant 0 : i32
    %33 = vector.broadcast %c0_i32_18 : i32 to vector<1x128xi32>
    %34 = arith.cmpi eq, %24, %33 : vector<1x128xi32>
    %c7_i32 = arith.constant 7 : i32
    %35 = vector.broadcast %c7_i32 : i32 to vector<1x128xi32>
    %36 = arith.select %34, %35, %28 : vector<1x128xi1>, vector<1x128xi32>
    %c1_i32 = arith.constant 1 : i32
    %37 = vector.broadcast %c1_i32 : i32 to vector<1x128xi32>
    %38 = arith.cmpi eq, %24, %37 : vector<1x128xi32>
    %c7_i32_19 = arith.constant 7 : i32
    %39 = vector.broadcast %c7_i32_19 : i32 to vector<1x128xi32>
    %40 = arith.select %38, %39, %32 : vector<1x128xi1>, vector<1x128xi32>
    %c1_i32_20 = arith.constant 1 : i32
    %41 = vector.broadcast %c1_i32_20 : i32 to vector<1x128xi32>
    %42 = arith.cmpi eq, %24, %41 : vector<1x128xi32>
    %c5_i32_21 = arith.constant 5 : i32
    %43 = vector.broadcast %c5_i32_21 : i32 to vector<1x128xi32>
    %44 = arith.select %42, %43, %36 : vector<1x128xi1>, vector<1x128xi32>
    %c2_i32 = arith.constant 2 : i32
    %45 = vector.broadcast %c2_i32 : i32 to vector<1x128xi32>
    %46 = arith.cmpi eq, %24, %45 : vector<1x128xi32>
    %c12_i32 = arith.constant 12 : i32
    %47 = vector.broadcast %c12_i32 : i32 to vector<1x128xi32>
    %48 = arith.select %46, %47, %40 : vector<1x128xi1>, vector<1x128xi32>
    %c2_i32_22 = arith.constant 2 : i32
    %49 = vector.broadcast %c2_i32_22 : i32 to vector<1x128xi32>
    %50 = arith.cmpi eq, %24, %49 : vector<1x128xi32>
    %c5_i32_23 = arith.constant 5 : i32
    %51 = vector.broadcast %c5_i32_23 : i32 to vector<1x128xi32>
    %52 = arith.select %50, %51, %44 : vector<1x128xi1>, vector<1x128xi32>
    %c3_i32 = arith.constant 3 : i32
    %53 = vector.broadcast %c3_i32 : i32 to vector<1x128xi32>
    %54 = arith.cmpi eq, %24, %53 : vector<1x128xi32>
    %c17_i32 = arith.constant 17 : i32
    %55 = vector.broadcast %c17_i32 : i32 to vector<1x128xi32>
    %56 = arith.select %54, %55, %48 : vector<1x128xi1>, vector<1x128xi32>
    %c3_i32_24 = arith.constant 3 : i32
    %57 = vector.broadcast %c3_i32_24 : i32 to vector<1x128xi32>
    %58 = arith.cmpi eq, %24, %57 : vector<1x128xi32>
    %c5_i32_25 = arith.constant 5 : i32
    %59 = vector.broadcast %c5_i32_25 : i32 to vector<1x128xi32>
    %60 = arith.select %58, %59, %52 : vector<1x128xi1>, vector<1x128xi32>
    %61 = arith.addi %56, %26 : vector<1x128xi32>
    %62 = arith.cmpi slt, %26, %60 : vector<1x128xi32>
    %c0_26 = arith.constant 0 : index
    %c0_27 = arith.constant 0 : index
    %63 = vector.load %arg2[%c0_26, %c0_27] : memref<8x1xi32, #tpu.memory_space<vmem>>, vector<8x1xi32>
    %64 = vector.broadcast %63 : vector<8x1xi32> to vector<8x128xi32>
    %65 = vector.broadcast %61 : vector<1x128xi32> to vector<8x128xi32>
    %66 = arith.shrsi %64, %65 : vector<8x128xi32>
    %c1_i32_28 = arith.constant 1 : i32
    %67 = vector.broadcast %c1_i32_28 : i32 to vector<8x128xi32>
    %68 = arith.andi %66, %67 : vector<8x128xi32>
    %c0_i32_29 = arith.constant 0 : i32
    %69 = vector.broadcast %c0_i32_29 : i32 to vector<8x128xi32>
    %70 = arith.cmpi sgt, %68, %69 : vector<8x128xi32>
    %71 = vector.broadcast %62 : vector<1x128xi1> to vector<8x128xi1>
    %72 = arith.andi %70, %71 : vector<8x128xi1>
    %cst_30 = arith.constant -1.000000e+08 : f32
    %73 = vector.broadcast %cst_30 : f32 to vector<8x128xf32>
    %74 = arith.select %72, %21, %73 : vector<8x128xi1>, vector<8x128xf32>
    %cst_31 = arith.constant -1.000000e+30 : f32
    %75 = vector.shape_cast %62 : vector<1x128xi1> to vector<1x128xi1>
    %76 = vector.broadcast %75 : vector<1x128xi1> to vector<8x128xi1>
    %77 = vector.broadcast %cst_31 : f32 to vector<8x128xf32>
    %78 = arith.select %76, %74, %77 : vector<8x128xi1>, vector<8x128xf32>
    %79 = vector.extract_strided_slice %26 {offsets = [0, 0], sizes = [1, 32], strides = [1, 1]} : vector<1x128xi32> to vector<1x32xi32>
    %cst_32 = arith.constant 0.000000e+00 : f32
    %80 = vector.broadcast %cst_32 : f32 to vector<8x1xf32>
    %cst_33 = arith.constant 0.000000e+00 : f32
    %81 = vector.broadcast %cst_33 : f32 to vector<8x1xf32>
    %82 = vector.extract_strided_slice %78 {offsets = [0, 0], sizes = [8, 32], strides = [1, 1]} : vector<8x128xf32> to vector<8x32xf32>
    %cst_34 = arith.constant dense<0xFF800000> : vector<8xf32>
    %83 = vector.multi_reduction <maximumf>, %82, %cst_34 [1] : vector<8x32xf32> to vector<8xf32>
    %84 = vector.shape_cast %83 : vector<8xf32> to vector<8x1xf32>
    %85 = vector.broadcast %84 : vector<8x1xf32> to vector<8x32xf32>
    %86 = arith.cmpf oeq, %82, %85 : vector<8x32xf32>
    %c32_i32 = arith.constant 32 : i32
    %87 = vector.shape_cast %79 : vector<1x32xi32> to vector<1x32xi32>
    %88 = vector.broadcast %87 : vector<1x32xi32> to vector<8x32xi32>
    %89 = vector.broadcast %c32_i32 : i32 to vector<8x32xi32>
    %90 = arith.select %86, %88, %89 : vector<8x32xi1>, vector<8x32xi32>
    %cst_35 = arith.constant dense<2147483647> : vector<8xi32>
    %91 = vector.multi_reduction <minsi>, %90, %cst_35 [1] : vector<8x32xi32> to vector<8xi32>
    %92 = vector.shape_cast %91 : vector<8xi32> to vector<8x1xi32>
    %93 = vector.broadcast %84 : vector<8x1xf32> to vector<8x32xf32>
    %94 = arith.subf %82, %93 : vector<8x32xf32>
    %95 = math.exp %94 : vector<8x32xf32>
    %cst_36 = arith.constant dense<0.000000e+00> : vector<8xf32>
    %96 = vector.multi_reduction <add>, %95, %cst_36 [1] : vector<8x32xf32> to vector<8xf32>
    %97 = vector.shape_cast %96 : vector<8xf32> to vector<8x1xf32>
    %98 = math.log %97 : vector<8x1xf32>
    %99 = arith.addf %84, %98 : vector<8x1xf32>
    %100 = arith.subf %84, %99 : vector<8x1xf32>
    %101 = arith.addf %80, %100 : vector<8x1xf32>
    %102 = vector.broadcast %99 : vector<8x1xf32> to vector<8x32xf32>
    %103 = arith.subf %82, %102 : vector<8x32xf32>
    %104 = arith.mulf %95, %103 : vector<8x32xf32>
    %cst_37 = arith.constant dense<0.000000e+00> : vector<8xf32>
    %105 = vector.multi_reduction <add>, %104, %cst_37 [1] : vector<8x32xf32> to vector<8xf32>
    %106 = vector.shape_cast %105 : vector<8xf32> to vector<8x1xf32>
    %107 = arith.divf %106, %97 : vector<8x1xf32>
    %108 = arith.subf %81, %107 : vector<8x1xf32>
    %109 = arith.sitofp %92 : vector<8x1xi32> to vector<8x1xf32>
    %110 = vector.extract_strided_slice %78 {offsets = [0, 32], sizes = [8, 32], strides = [1, 1]} : vector<8x128xf32> to vector<8x32xf32>
    %cst_38 = arith.constant dense<0xFF800000> : vector<8xf32>
    %111 = vector.multi_reduction <maximumf>, %110, %cst_38 [1] : vector<8x32xf32> to vector<8xf32>
    %112 = vector.shape_cast %111 : vector<8xf32> to vector<8x1xf32>
    %113 = vector.broadcast %112 : vector<8x1xf32> to vector<8x32xf32>
    %114 = arith.cmpf oeq, %110, %113 : vector<8x32xf32>
    %c32_i32_39 = arith.constant 32 : i32
    %115 = vector.shape_cast %79 : vector<1x32xi32> to vector<1x32xi32>
    %116 = vector.broadcast %115 : vector<1x32xi32> to vector<8x32xi32>
    %117 = vector.broadcast %c32_i32_39 : i32 to vector<8x32xi32>
    %118 = arith.select %114, %116, %117 : vector<8x32xi1>, vector<8x32xi32>
    %cst_40 = arith.constant dense<2147483647> : vector<8xi32>
    %119 = vector.multi_reduction <minsi>, %118, %cst_40 [1] : vector<8x32xi32> to vector<8xi32>
    %120 = vector.shape_cast %119 : vector<8xi32> to vector<8x1xi32>
    %121 = vector.broadcast %112 : vector<8x1xf32> to vector<8x32xf32>
    %122 = arith.subf %110, %121 : vector<8x32xf32>
    %123 = math.exp %122 : vector<8x32xf32>
    %cst_41 = arith.constant dense<0.000000e+00> : vector<8xf32>
    %124 = vector.multi_reduction <add>, %123, %cst_41 [1] : vector<8x32xf32> to vector<8xf32>
    %125 = vector.shape_cast %124 : vector<8xf32> to vector<8x1xf32>
    %126 = math.log %125 : vector<8x1xf32>
    %127 = arith.addf %112, %126 : vector<8x1xf32>
    %128 = arith.subf %112, %127 : vector<8x1xf32>
    %129 = arith.addf %101, %128 : vector<8x1xf32>
    %130 = vector.broadcast %127 : vector<8x1xf32> to vector<8x32xf32>
    %131 = arith.subf %110, %130 : vector<8x32xf32>
    %132 = arith.mulf %123, %131 : vector<8x32xf32>
    %cst_42 = arith.constant dense<0.000000e+00> : vector<8xf32>
    %133 = vector.multi_reduction <add>, %132, %cst_42 [1] : vector<8x32xf32> to vector<8xf32>
    %134 = vector.shape_cast %133 : vector<8xf32> to vector<8x1xf32>
    %135 = arith.divf %134, %125 : vector<8x1xf32>
    %136 = arith.subf %108, %135 : vector<8x1xf32>
    %137 = arith.sitofp %120 : vector<8x1xi32> to vector<8x1xf32>
    %138 = vector.extract_strided_slice %78 {offsets = [0, 64], sizes = [8, 32], strides = [1, 1]} : vector<8x128xf32> to vector<8x32xf32>
    %cst_43 = arith.constant dense<0xFF800000> : vector<8xf32>
    %139 = vector.multi_reduction <maximumf>, %138, %cst_43 [1] : vector<8x32xf32> to vector<8xf32>
    %140 = vector.shape_cast %139 : vector<8xf32> to vector<8x1xf32>
    %141 = vector.broadcast %140 : vector<8x1xf32> to vector<8x32xf32>
    %142 = arith.cmpf oeq, %138, %141 : vector<8x32xf32>
    %c32_i32_44 = arith.constant 32 : i32
    %143 = vector.shape_cast %79 : vector<1x32xi32> to vector<1x32xi32>
    %144 = vector.broadcast %143 : vector<1x32xi32> to vector<8x32xi32>
    %145 = vector.broadcast %c32_i32_44 : i32 to vector<8x32xi32>
    %146 = arith.select %142, %144, %145 : vector<8x32xi1>, vector<8x32xi32>
    %cst_45 = arith.constant dense<2147483647> : vector<8xi32>
    %147 = vector.multi_reduction <minsi>, %146, %cst_45 [1] : vector<8x32xi32> to vector<8xi32>
    %148 = vector.shape_cast %147 : vector<8xi32> to vector<8x1xi32>
    %149 = vector.broadcast %140 : vector<8x1xf32> to vector<8x32xf32>
    %150 = arith.subf %138, %149 : vector<8x32xf32>
    %151 = math.exp %150 : vector<8x32xf32>
    %cst_46 = arith.constant dense<0.000000e+00> : vector<8xf32>
    %152 = vector.multi_reduction <add>, %151, %cst_46 [1] : vector<8x32xf32> to vector<8xf32>
    %153 = vector.shape_cast %152 : vector<8xf32> to vector<8x1xf32>
    %154 = math.log %153 : vector<8x1xf32>
    %155 = arith.addf %140, %154 : vector<8x1xf32>
    %156 = arith.subf %140, %155 : vector<8x1xf32>
    %157 = arith.addf %129, %156 : vector<8x1xf32>
    %158 = vector.broadcast %155 : vector<8x1xf32> to vector<8x32xf32>
    %159 = arith.subf %138, %158 : vector<8x32xf32>
    %160 = arith.mulf %151, %159 : vector<8x32xf32>
    %cst_47 = arith.constant dense<0.000000e+00> : vector<8xf32>
    %161 = vector.multi_reduction <add>, %160, %cst_47 [1] : vector<8x32xf32> to vector<8xf32>
    %162 = vector.shape_cast %161 : vector<8xf32> to vector<8x1xf32>
    %163 = arith.divf %162, %153 : vector<8x1xf32>
    %164 = arith.subf %136, %163 : vector<8x1xf32>
    %165 = arith.sitofp %148 : vector<8x1xi32> to vector<8x1xf32>
    %166 = vector.extract_strided_slice %78 {offsets = [0, 96], sizes = [8, 32], strides = [1, 1]} : vector<8x128xf32> to vector<8x32xf32>
    %cst_48 = arith.constant dense<0xFF800000> : vector<8xf32>
    %167 = vector.multi_reduction <maximumf>, %166, %cst_48 [1] : vector<8x32xf32> to vector<8xf32>
    %168 = vector.shape_cast %167 : vector<8xf32> to vector<8x1xf32>
    %169 = vector.broadcast %168 : vector<8x1xf32> to vector<8x32xf32>
    %170 = arith.cmpf oeq, %166, %169 : vector<8x32xf32>
    %c32_i32_49 = arith.constant 32 : i32
    %171 = vector.shape_cast %79 : vector<1x32xi32> to vector<1x32xi32>
    %172 = vector.broadcast %171 : vector<1x32xi32> to vector<8x32xi32>
    %173 = vector.broadcast %c32_i32_49 : i32 to vector<8x32xi32>
    %174 = arith.select %170, %172, %173 : vector<8x32xi1>, vector<8x32xi32>
    %cst_50 = arith.constant dense<2147483647> : vector<8xi32>
    %175 = vector.multi_reduction <minsi>, %174, %cst_50 [1] : vector<8x32xi32> to vector<8xi32>
    %176 = vector.shape_cast %175 : vector<8xi32> to vector<8x1xi32>
    %177 = vector.broadcast %168 : vector<8x1xf32> to vector<8x32xf32>
    %178 = arith.subf %166, %177 : vector<8x32xf32>
    %179 = math.exp %178 : vector<8x32xf32>
    %cst_51 = arith.constant dense<0.000000e+00> : vector<8xf32>
    %180 = vector.multi_reduction <add>, %179, %cst_51 [1] : vector<8x32xf32> to vector<8xf32>
    %181 = vector.shape_cast %180 : vector<8xf32> to vector<8x1xf32>
    %182 = math.log %181 : vector<8x1xf32>
    %183 = arith.addf %168, %182 : vector<8x1xf32>
    %184 = arith.subf %168, %183 : vector<8x1xf32>
    %185 = arith.addf %157, %184 : vector<8x1xf32>
    %186 = vector.broadcast %183 : vector<8x1xf32> to vector<8x32xf32>
    %187 = arith.subf %166, %186 : vector<8x32xf32>
    %188 = arith.mulf %179, %187 : vector<8x32xf32>
    %cst_52 = arith.constant dense<0.000000e+00> : vector<8xf32>
    %189 = vector.multi_reduction <add>, %188, %cst_52 [1] : vector<8x32xf32> to vector<8xf32>
    %190 = vector.shape_cast %189 : vector<8xf32> to vector<8x1xf32>
    %191 = arith.divf %190, %181 : vector<8x1xf32>
    %192 = arith.subf %164, %191 : vector<8x1xf32>
    %193 = arith.sitofp %176 : vector<8x1xi32> to vector<8x1xf32>
    %cst_53 = arith.constant 0.000000e+00 : f32
    %194 = vector.broadcast %cst_53 : f32 to vector<8x2xf32>
    %195 = tpu.concatenate %185, %192, %109, %137, %165, %193, %194 in 1 : vector<8x1xf32>, vector<8x1xf32>, vector<8x1xf32>, vector<8x1xf32>, vector<8x1xf32>, vector<8x1xf32>, vector<8x2xf32> -> vector<8x8xf32>
    %c0_54 = arith.constant 0 : index
    %c0_55 = arith.constant 0 : index
    %196 = vector.load %arg7[%c0_54, %c0_55] : memref<8x8xf32, #tpu.memory_space<vmem>>, vector<8x8xf32>
    tpu.vector_store %arg7[%c0_54, %c0_55], %195 {strides = array<i32>} : memref<8x8xf32, #tpu.memory_space<vmem>>, vector<8x8xf32>,
    return
  }
  func.func @transform_0(%arg0: i32) -> (i32, i32) {
    %c0_i32 = arith.constant 0 : i32
    %c0_i32_0 = arith.constant 0 : i32
    return %arg0, %c0_i32 : i32, i32
  }
  func.func @transform_1(%arg0: i32) -> (i32, i32) {
    %c0_i32 = arith.constant 0 : i32
    %c0_i32_0 = arith.constant 0 : i32
    return %arg0, %c0_i32 : i32, i32
  }
  func.func @transform_2(%arg0: i32) -> (i32, i32) {
    %c0_i32 = arith.constant 0 : i32
    %c0_i32_0 = arith.constant 0 : i32
    %c0_i32_1 = arith.constant 0 : i32
    return %c0_i32, %c0_i32_0 : i32, i32
  }
  func.func @transform_3(%arg0: i32) -> (i32, i32) {
    %c0_i32 = arith.constant 0 : i32
    %c0_i32_0 = arith.constant 0 : i32
    %c0_i32_1 = arith.constant 0 : i32
    return %c0_i32, %c0_i32_0 : i32, i32
  }
  func.func @transform_4(%arg0: i32) -> (i32, i32) {
    %c0_i32 = arith.constant 0 : i32
    %c0_i32_0 = arith.constant 0 : i32
    %c0_i32_1 = arith.constant 0 : i32
    return %c0_i32, %c0_i32_0 : i32, i32
  }
  func.func @transform_5(%arg0: i32) -> (i32, i32) {
    %c0_i32 = arith.constant 0 : i32
    %c0_i32_0 = arith.constant 0 : i32
    %c0_i32_1 = arith.constant 0 : i32
    return %c0_i32, %c0_i32_0 : i32, i32
  }
  func.func @transform_6(%arg0: i32) -> (i32, i32) {
    %c0_i32 = arith.constant 0 : i32
    %c0_i32_0 = arith.constant 0 : i32
    return %arg0, %c0_i32 : i32, i32
  }
}

</mosaic_0001>

<llo_original>
// kernel: tpu_custom_call.1
$region0: #{tpu_custom_call.1}
  #allocation0 [shape = 'u32[]', space=smem, size = 0x4, offset = 0x4, fixed_abs, tag = 'smem constant byte address 0x4 - core index']
  #allocation1 [shape = 'u32[144,128]{1,0:T(1,128)}', space=vmem, size = 0x12000, scoped, tag = 'internal scratch']
  %s0 = inlined_call_operand.vmem [shape: bf16[8,32], index: 0, kind: input, shape index: {}]
  %s1 = inlined_call_operand.vmem [shape: s32[8,1], index: 1, kind: input, shape index: {}]
  %s2 = inlined_call_operand.hbm [shape: bf16[32,32], index: 2, kind: input, shape index: {}]
  %s3 = inlined_call_operand.hbm [shape: bf16[32,128], index: 3, kind: input, shape index: {}]
  %s4 = inlined_call_operand.hbm [shape: bf16[128,128], index: 4, kind: input, shape index: {}]
  %s5 = inlined_call_operand.vmem [shape: f32[8,128], index: 5, kind: input, shape index: {}]
  %s6 = inlined_call_operand.hbm [shape: f32[8,8], index: 6, kind: output, shape index: {}]
  %s7 = sld [smem:[#allocation0]]
  $region46: #{tpu_custom_call.1} parent=0
    _
  %s9 = ssub.s32 1, %s7
  %s10 = scalar_select 0, %s9, %s7
  $region1: #{tpu_custom_call.1} parent=0
    #allocation2 [shape = 'u8[8192]{0}', space=vmem, size = 0x2000, scoped, tag = 'input window, operand 2, single buffered']
    #allocation3 [shape = 's32[1]{0}', space=sflag, size = 0x4, scoped, tag = 'scoped memory for tpu_custom_call.1']
    #allocation4 [shape = 's32[1]{0}', space=sflag, size = 0x4, scoped, tag = 'scoped memory for tpu_custom_call.1']
    #allocation5 [shape = 'u8[8192]{0}', space=vmem, size = 0x2000, scoped, tag = 'input window, operand 3, single buffered']
    #allocation6 [shape = 's32[1]{0}', space=sflag, size = 0x4, scoped, tag = 'scoped memory for tpu_custom_call.1']
    #allocation7 [shape = 'u8[32768]{0}', space=vmem, size = 0x8000, scoped, tag = 'input window, operand 4, single buffered']
    #allocation8 [shape = 'u8[4096]{0}', space=vmem, size = 0x1000, scoped, tag = 'output window, operand 0, single buffered']
    %11 = vsyncpa [#allocation3], 0
    %12 = vsyncpa [#allocation6], 0
    %13 = vsyncpa [#allocation4], 0
    // Predicated region
    $region2: #{tpu_custom_call.1} parent=1 // pred_check
      _
    $region3: #{tpu_custom_call.1} parent=1 // pred_check_branch
      %15 = sbr.rel (0) target = $region5
    $region4: #{tpu_custom_call.1} parent=1 // pred_region
      _
    $region5: #{tpu_custom_call.1} parent=1 // pred_fallthru
      _
    // Predicated region
    $region6: #{tpu_custom_call.1} parent=1 // pred_check
      _
    $region7: #{tpu_custom_call.1} parent=1 // pred_check_branch
      %17 = sbr.rel (0) target = $region9
    $region8: #{tpu_custom_call.1} parent=1 // pred_region
      _
    $region9: #{tpu_custom_call.1} parent=1 // pred_fallthru
      _
    // Predicated region
    $region10: #{tpu_custom_call.1} parent=1 // pred_check
      _
    $region11: #{tpu_custom_call.1} parent=1 // pred_check_branch
      %19 = sbr.rel (0) target = $region13
    $region12: #{tpu_custom_call.1} parent=1 // pred_region
      %s21 = ssub.s32 256, 256
      %22 = vsyncadd [#allocation3], %s21
      %s23 = sshll.u32 [#allocation2], 4
      %s24 = int_to_ptr.vmem [resolvable:$true] %s23
      %29 = dma.hbm_to_vmem [thread:$0]  %s2, 256, %s24, [#allocation3], 64, 64, 4
    $region13: #{tpu_custom_call.1} parent=1 // pred_fallthru
      _
    // Predicated region
    $region14: #{tpu_custom_call.1} parent=1 // pred_check
      _
    $region15: #{tpu_custom_call.1} parent=1 // pred_check_branch
      %31 = sbr.rel (0) target = $region17
    $region16: #{tpu_custom_call.1} parent=1 // pred_region
      %s33 = ssub.s32 256, 256
      %34 = vsyncadd [#allocation6], %s33
      %s35 = sshll.u32 [#allocation5], 4
      %s36 = int_to_ptr.vmem [resolvable:$true] %s35
      %41 = dma.hbm_to_vmem [thread:$0]  %s3, 256, %s36, [#allocation6], 64, 64, 4
    $region17: #{tpu_custom_call.1} parent=1 // pred_fallthru
      _
    // Predicated region
    $region18: #{tpu_custom_call.1} parent=1 // pred_check
      _
    $region19: #{tpu_custom_call.1} parent=1 // pred_check_branch
      %43 = sbr.rel (0) target = $region21
    $region20: #{tpu_custom_call.1} parent=1 // pred_region
      %s45 = ssub.s32 1024, 1024
      %46 = vsyncadd [#allocation6], %s45
      %s47 = sshll.u32 [#allocation7], 4
      %s48 = int_to_ptr.vmem [resolvable:$true] %s47
      %53 = dma.hbm_to_vmem [thread:$0]  %s4, 1024, %s48, [#allocation6], 64, 64, 4
    $region21: #{tpu_custom_call.1} parent=1 // pred_fallthru
      _
    // Predicated region
    $region22: #{tpu_custom_call.1} parent=1 // pred_check
      _
    $region23: #{tpu_custom_call.1} parent=1 // pred_check_branch
      %55 = sbr.rel (0) target = $region25
    $region24: #{tpu_custom_call.1} parent=1 // pred_region
      _
    $region25: #{tpu_custom_call.1} parent=1 // pred_fallthru
      _
    // Predicated region
    $region26: #{tpu_custom_call.1} parent=1 // pred_check
      _
    $region27: #{tpu_custom_call.1} parent=1 // pred_check_branch
      %57 = sbr.rel (0) target = $region29
    $region28: #{tpu_custom_call.1} parent=1 // pred_region
      %58 = dma.done [#allocation3], 256
    $region29: #{tpu_custom_call.1} parent=1 // pred_fallthru
      _
    // Predicated region
    $region30: #{tpu_custom_call.1} parent=1 // pred_check
      _
    $region31: #{tpu_custom_call.1} parent=1 // pred_check_branch
      %60 = sbr.rel (0) target = $region33
    $region32: #{tpu_custom_call.1} parent=1 // pred_region
      %61 = dma.done [#allocation6], 256
    $region33: #{tpu_custom_call.1} parent=1 // pred_fallthru
      _
    // Predicated region
    $region34: #{tpu_custom_call.1} parent=1 // pred_check
      _
    $region35: #{tpu_custom_call.1} parent=1 // pred_check_branch
      %63 = sbr.rel (0) target = $region37
    $region36: #{tpu_custom_call.1} parent=1 // pred_region
      %64 = dma.done [#allocation6], 1024
    $region37: #{tpu_custom_call.1} parent=1 // pred_fallthru
      _
    %v66 = vld [vmem:[%s5] sm:$0x1]
    %v67 = vld [vmem:[%s5 + $0x1] sm:$0x1]
    %v68 = vld [vmem:[%s5 + $0x2] sm:$0x1]
    %v69 = vld [vmem:[%s0] sm:$0xf]
    %v70 = vld [vmem:[#allocation2] sm:$0xf]
    %v71 = vld [vmem:[#allocation2 + $0x4] sm:$0xf]
    %v72 = vld [vmem:[#allocation2 + $0x8] sm:$0xf]
    %v73 = vld [vmem:[#allocation2 + $0xc] sm:$0xf]
    %v74 = vlaneseq
    %v75 = vshrl.u32 %v74, 7
    %v76 = vsub.s32 0, %v75
    %v77 = vrot.slane %v66, %v76
    %v82 = vunpack.c.l.b16 %v70
    %v83 = vunpack.c.l.b16 %v71
    %v84 = vunpack.c.l.b16 %v72
    %v85 = vunpack.c.l.b16 %v73
    %v86 = vpack.c.b16 %v83, %v82
    %v87 = vpack.c.b16 %v85, %v84
    %vm90 = vcmask 261120
    %v92 = vsel %vm90, %v69, 0
    %94 = vmatprep.subr.bf16.mxu0 0
    %95 = vmatpush1.bf16.msra.mxu0 0
    %96 = vmatprep.subr.bf16.mxu0 0
    %97 = vmatpush1.bf16.msra.mxu0 0
    %98 = vmatprep.subr.bf16.mxu0 0
    %99 = vmatpush1.bf16.msra.mxu0 0
    %100 = vmatprep.subr.bf16.mxu0 0
    %101 = vmatpush1.bf16.msra.mxu0 0
    %102 = vmatprep.subr.bf16.mxu0 0
    %103 = vmatpush1.bf16.msra.mxu0 0
    %104 = vmatprep.subr.bf16.mxu0 0
    %105 = vmatpush1.bf16.msra.mxu0 0
    %106 = vmatprep.subr.bf16.mxu0 0
    %107 = vmatpush1.bf16.msra.mxu0 %v87
    %108 = vmatprep.subr.bf16.mxu0 0
    %109 = vmatpush1.bf16.msra.mxu0 %v86
    %110 = vmatprep.subr.bf16.mxu0 0
    %111 = vmatpush2.bf16.msra.mxu0 0
    %112 = vmatprep.subr.bf16.mxu0 0
    %113 = vmatpush2.bf16.msra.mxu0 0
    %114 = vmatprep.subr.bf16.mxu0 0
    %115 = vmatpush2.bf16.msra.mxu0 0
    %116 = vmatprep.subr.bf16.mxu0 0
    %117 = vmatpush2.bf16.msra.mxu0 0
    %118 = vmatprep.subr.bf16.mxu0 0
    %119 = vmatpush2.bf16.msra.mxu0 0
    %120 = vmatprep.subr.bf16.mxu0 0
    %121 = vmatpush2.bf16.msra.mxu0 0
    %122 = vmatprep.subr.bf16.mxu0 0
    %123 = vmatpush2.bf16.msra.mxu0 0
    %124 = vmatprep.subr.bf16.mxu0 0
    %125 = vmatpush2.bf16.msra.mxu0 0
    %126 = vmatprep.mubr.bf16.mxu0 0
    %127 = vmatmul.mubr.bf16.gmra.mxu0 %v92
    %v128 = vpop.f32.mrf.mxu0
    %v129 = vadd.f32 %v77, %v128
    %v130 = vpop.f32.mrf.mxu0
    %v131 = vpop.f32.mrf.mxu0
    %v132 = vpop.f32.mrf.mxu0
    %133 = vdwg.mxu0
    %v134 = vmax.f32 %v129, 0.0
    %v135 = vpack.c.bf16 %v134, %v134
    %v136 = vld [vmem:[#allocation5] sm:$0xf]
    %v137 = vld [vmem:[#allocation5 + $0x4] sm:$0xf]
    %v138 = vld [vmem:[#allocation5 + $0x8] sm:$0xf]
    %v139 = vld [vmem:[#allocation5 + $0xc] sm:$0xf]
    %v140 = vlaneseq
    %v141 = vshrl.u32 %v140, 7
    %v142 = vsub.s32 0, %v141
    %v143 = vrot.slane %v67, %v142
    %v148 = vunpack.c.l.b16 %v136
    %v149 = vunpack.c.l.b16 %v137
    %v150 = vunpack.c.l.b16 %v138
    %v151 = vunpack.c.l.b16 %v139
    %v152 = vpack.c.b16 %v149, %v148
    %v153 = vpack.c.b16 %v151, %v150
    %v157 = vsel %vm90, %v135, 0
    %159 = vmatprep.subr.bf16.mxu0 0
    %160 = vmatpush1.bf16.msra.mxu0 0
    %161 = vmatprep.subr.bf16.mxu0 0
    %162 = vmatpush1.bf16.msra.mxu0 0
    %163 = vmatprep.subr.bf16.mxu0 0
    %164 = vmatpush1.bf16.msra.mxu0 0
    %165 = vmatprep.subr.bf16.mxu0 0
    %166 = vmatpush1.bf16.msra.mxu0 0
    %167 = vmatprep.subr.bf16.mxu0 0
    %168 = vmatpush1.bf16.msra.mxu0 0
    %169 = vmatprep.subr.bf16.mxu0 0
    %170 = vmatpush1.bf16.msra.mxu0 0
    %171 = vmatprep.subr.bf16.mxu0 0
    %172 = vmatpush1.bf16.msra.mxu0 %v153
    %173 = vmatprep.subr.bf16.mxu0 0
    %174 = vmatpush1.bf16.msra.mxu0 %v152
    %175 = vmatprep.subr.bf16.mxu0 0
    %176 = vmatpush2.bf16.msra.mxu0 0
    %177 = vmatprep.subr.bf16.mxu0 0
    %178 = vmatpush2.bf16.msra.mxu0 0
    %179 = vmatprep.subr.bf16.mxu0 0
    %180 = vmatpush2.bf16.msra.mxu0 0
    %181 = vmatprep.subr.bf16.mxu0 0
    %182 = vmatpush2.bf16.msra.mxu0 0
    %183 = vmatprep.subr.bf16.mxu0 0
    %184 = vmatpush2.bf16.msra.mxu0 0
    %185 = vmatprep.subr.bf16.mxu0 0
    %186 = vmatpush2.bf16.msra.mxu0 0
    %187 = vmatprep.subr.bf16.mxu0 0
    %188 = vmatpush2.bf16.msra.mxu0 0
    %189 = vmatprep.subr.bf16.mxu0 0
    %190 = vmatpush2.bf16.msra.mxu0 0
    %191 = vmatprep.mubr.bf16.mxu0 0
    %192 = vmatmul.mubr.bf16.gmra.mxu0 %v157
    %v193 = vpop.f32.mrf.mxu0
    %v194 = vadd.f32 %v143, %v193
    %v195 = vpop.f32.mrf.mxu0
    %v196 = vpop.f32.mrf.mxu0
    %v197 = vpop.f32.mrf.mxu0
    %198 = vdwg.mxu0
    %v199 = vmax.f32 %v194, 0.0
    %v200 = vpack.c.bf16 %v199, %v199
    %v201 = vld [vmem:[#allocation7] sm:$0xf]
    %v202 = vld [vmem:[#allocation7 + $0x4] sm:$0xf]
    %v203 = vld [vmem:[#allocation7 + $0x8] sm:$0xf]
    %v204 = vld [vmem:[#allocation7 + $0xc] sm:$0xf]
    %v205 = vld [vmem:[#allocation7 + $0x10] sm:$0xf]
    %v206 = vld [vmem:[#allocation7 + $0x14] sm:$0xf]
    %v207 = vld [vmem:[#allocation7 + $0x18] sm:$0xf]
    %v208 = vld [vmem:[#allocation7 + $0x1c] sm:$0xf]
    %v209 = vld [vmem:[#allocation7 + $0x20] sm:$0xf]
    %v210 = vld [vmem:[#allocation7 + $0x24] sm:$0xf]
    %v211 = vld [vmem:[#allocation7 + $0x28] sm:$0xf]
    %v212 = vld [vmem:[#allocation7 + $0x2c] sm:$0xf]
    %v213 = vld [vmem:[#allocation7 + $0x30] sm:$0xf]
    %v214 = vld [vmem:[#allocation7 + $0x34] sm:$0xf]
    %v215 = vld [vmem:[#allocation7 + $0x38] sm:$0xf]
    %v216 = vld [vmem:[#allocation7 + $0x3c] sm:$0xf]
    %v217 = vlaneseq
    %v218 = vshrl.u32 %v217, 7
    %v219 = vsub.s32 0, %v218
    %v220 = vrot.slane %v68, %v219
    %v237 = vunpack.c.l.b16 %v201
    %v238 = vunpack.c.l.b16 %v202
    %v239 = vunpack.c.l.b16 %v203
    %v240 = vunpack.c.l.b16 %v204
    %v241 = vunpack.c.l.b16 %v205
    %v242 = vunpack.c.l.b16 %v206
    %v243 = vunpack.c.l.b16 %v207
    %v244 = vunpack.c.l.b16 %v208
    %v245 = vunpack.c.l.b16 %v209
    %v246 = vunpack.c.l.b16 %v210
    %v247 = vunpack.c.l.b16 %v211
    %v248 = vunpack.c.l.b16 %v212
    %v249 = vunpack.c.l.b16 %v213
    %v250 = vunpack.c.l.b16 %v214
    %v251 = vunpack.c.l.b16 %v215
    %v252 = vunpack.c.l.b16 %v216
    %v253 = vpack.c.b16 %v238, %v237
    %v254 = vpack.c.b16 %v240, %v239
    %v255 = vpack.c.b16 %v242, %v241
    %v256 = vpack.c.b16 %v244, %v243
    %v257 = vpack.c.b16 %v246, %v245
    %v258 = vpack.c.b16 %v248, %v247
    %v259 = vpack.c.b16 %v250, %v249
    %v260 = vpack.c.b16 %v252, %v251
    %269 = vmatprep.subr.bf16.mxu0 0
    %270 = vmatpush1.bf16.msra.mxu0 %v260
    %271 = vmatprep.subr.bf16.mxu0 0
    %272 = vmatpush1.bf16.msra.mxu0 %v259
    %273 = vmatprep.subr.bf16.mxu0 0
    %274 = vmatpush1.bf16.msra.mxu0 %v258
    %275 = vmatprep.subr.bf16.mxu0 0
    %276 = vmatpush1.bf16.msra.mxu0 %v257
    %277 = vmatprep.subr.bf16.mxu0 0
    %278 = vmatpush1.bf16.msra.mxu0 %v256
    %279 = vmatprep.subr.bf16.mxu0 0
    %280 = vmatpush1.bf16.msra.mxu0 %v255
    %281 = vmatprep.subr.bf16.mxu0 0
    %282 = vmatpush1.bf16.msra.mxu0 %v254
    %283 = vmatprep.subr.bf16.mxu0 0
    %284 = vmatpush1.bf16.msra.mxu0 %v253
    %285 = vmatprep.subr.bf16.mxu0 0
    %286 = vmatpush2.bf16.msra.mxu0 0
    %287 = vmatprep.subr.bf16.mxu0 0
    %288 = vmatpush2.bf16.msra.mxu0 0
    %289 = vmatprep.subr.bf16.mxu0 0
    %290 = vmatpush2.bf16.msra.mxu0 0
    %291 = vmatprep.subr.bf16.mxu0 0
    %292 = vmatpush2.bf16.msra.mxu0 0
    %293 = vmatprep.subr.bf16.mxu0 0
    %294 = vmatpush2.bf16.msra.mxu0 0
    %295 = vmatprep.subr.bf16.mxu0 0
    %296 = vmatpush2.bf16.msra.mxu0 0
    %297 = vmatprep.subr.bf16.mxu0 0
    %298 = vmatpush2.bf16.msra.mxu0 0
    %299 = vmatprep.subr.bf16.mxu0 0
    %300 = vmatpush2.bf16.msra.mxu0 0
    %301 = vmatprep.mubr.bf16.mxu0 0
    %302 = vmatmul.mubr.bf16.gmra.mxu0 %v200
    %v303 = vpop.f32.mrf.mxu0
    %v304 = vadd.f32 %v220, %v303
    %v305 = vpop.f32.mrf.mxu0
    %v306 = vpop.f32.mrf.mxu0
    %v307 = vpop.f32.mrf.mxu0
    %308 = vdwg.mxu0
    %v309 = vlaneseq
    %v310 = vand.u32 %v309, 127
    %v311 = vshra.s32 %v310, 5
    %v312 = vand.u32 %v310, 31
    %vm313 = vcmp.eq.s32.totalorder %v311, 0
    %v314 = vsel %vm313, 7, 0
    %vm315 = vcmp.eq.s32.totalorder %v311, 1
    %v316 = vsel %vm315, 7, 0
    %v317 = vsel %vm315, 5, %v314
    %vm318 = vcmp.eq.s32.totalorder %v311, 2
    %v319 = vsel %vm318, 12, %v316
    %v320 = vsel %vm318, 5, %v317
    %vm321 = vcmp.eq.s32.totalorder %v311, 3
    %v322 = vsel %vm321, 17, %v319
    %v323 = vsel %vm321, 5, %v320
    %v324 = vadd.s32 %v322, %v312
    %vm325 = vcmp.lt.s32.totalorder %v312, %v323
    %v326 = vld [vmem:[%s1] sm:$0xff]
    %327 = vset.pattern.permute.xlu0 0
    %328 = vperm.xlu0 %327, %v326
    %v329 = vpop.permute.xlu0 %328
    %v330 = vshra.s32 %v329, %v324
    %v331 = vand.u32 %v330, 1
    %vm332 = vcmp.gt.s32.totalorder %v331, 0
    %v333 = vsel %vm325, 1, 0
    %vm334 = vcmp.eq.s32.totalorder %v333, 1
    %vm335 = vmand %vm332, %vm334
    %v336 = vsel %vm335, %v304, -1e+08
    %v337 = vsel %vm334, %v336, -1e+30
    %v338 = vsel %vm90, %v337, -inf
    %339 = vmax.xlane.f32.xlu0 %v338
    %v340 = vpop.xlane.xlu0 %339
    %vm341 = vcmp.eq.f32.partialorder %v337, %v340
    %v342 = vsel %vm341, %v312, 32
    %v343 = vsel %vm90, %v342, 2147483647
    %v344 = vand.u32 %v343, 65535
    %v345 = vshra.s32 %v343, 16
    %v346 = vcvt.s32.f32 %v344
    %v347 = vcvt.s32.f32 %v345
    %348 = vmin.xlane.f32.xlu0 %v347
    %v349 = vpop.xlane.xlu0 %348
    %vm350 = vcmp.eq.f32.partialorder %v347, %v349
    %v351 = vsel %vm350, %v346, inf
    %352 = vmin.xlane.f32.xlu0 %v351
    %v353 = vpop.xlane.xlu0 %352
    %v354 = vcvt.f32.s32 %v353
    %v355 = vcvt.f32.s32 %v349
    %v356 = vshll.u32 %v355, 16
    %v357 = vadd.s32 %v356, %v354
    %v358 = vsub.f32 %v337, %v340
    %v359 = vmul.f32 %v358, 1.442695
    %v360 = vpow.pop %v359
    %v361 = vsel %vm90, %v360, 0.0
    %362 = vadd.xlane.f32.xlu0 %v361
    %v363 = vpop.xlane.xlu0 %362
    %v364 = vlog2.pop %v363
    %v365 = vmul.f32 %v364, 0.6931472
    %v366 = vadd.f32 %v340, %v365
    %v367 = vsub.f32 %v340, %v366
    %v368 = vadd.f32 %v367, 0.0
    %v369 = vsub.f32 %v337, %v366
    %v370 = vmul.f32 %v360, %v369
    %v371 = vsel %vm90, %v370, 0.0
    %372 = vadd.xlane.f32.xlu0 %v371
    %v373 = vpop.xlane.xlu0 %372
    %v374 = vrcp.pop %v363
    %v375 = vmul.f32 %v373, %v374
    %v376 = vsub.f32 0.0, %v375
    %v377 = vcvt.s32.f32 %v357
    %vm378 = vcmask 523520
    %v379 = vsel %vm378, %v337, -inf
    %380 = vmax.xlane.f32.xlu0 %v379
    %v381 = vpop.xlane.xlu0 %380
    %vm382 = vcmp.eq.f32.partialorder %v337, %v381
    %383 = vrot.lane.b32.xlu0 %v312, 32
    %v384 = vpop.permute.xlu0 %383
    %v385 = vsel %vm382, %v384, 32
    %v386 = vsel %vm378, %v385, 2147483647
    %v387 = vand.u32 %v386, 65535
    %v388 = vshra.s32 %v386, 16
    %v389 = vcvt.s32.f32 %v387
    %v390 = vcvt.s32.f32 %v388
    %391 = vmin.xlane.f32.xlu0 %v390
    %v392 = vpop.xlane.xlu0 %391
    %vm393 = vcmp.eq.f32.partialorder %v390, %v392
    %v394 = vsel %vm393, %v389, inf
    %395 = vmin.xlane.f32.xlu0 %v394
    %v396 = vpop.xlane.xlu0 %395
    %v397 = vcvt.f32.s32 %v396
    %v398 = vcvt.f32.s32 %v392
    %v399 = vshll.u32 %v398, 16
    %v400 = vadd.s32 %v399, %v397
    %v401 = vsub.f32 %v337, %v381
    %v402 = vmul.f32 %v401, 1.442695
    %v403 = vpow.pop %v402
    %405 = vrot.lane.b32.xlu0 %v403, 96
    %v406 = vpop.permute.xlu0 %405
    %v408 = vsel %vm90, %v406, 0.0
    %409 = vadd.xlane.f32.xlu0 %v408
    %v410 = vpop.xlane.xlu0 %409
    %v411 = vlog2.pop %v410
    %v412 = vmul.f32 %v411, 0.6931472
    %v413 = vadd.f32 %v381, %v412
    %v414 = vsub.f32 %v381, %v413
    %v415 = vadd.f32 %v368, %v414
    %v416 = vsub.f32 %v337, %v413
    %v417 = vmul.f32 %v403, %v416
    %419 = vrot.lane.b32.xlu0 %v417, 96
    %v420 = vpop.permute.xlu0 %419
    %v422 = vsel %vm90, %v420, 0.0
    %423 = vadd.xlane.f32.xlu0 %v422
    %v424 = vpop.xlane.xlu0 %423
    %v425 = vrcp.pop %v410
    %v426 = vmul.f32 %v424, %v425
    %v427 = vsub.f32 %v376, %v426
    %v428 = vcvt.s32.f32 %v400
    %vm429 = vcmask 785920
    %v430 = vsel %vm429, %v337, -inf
    %431 = vmax.xlane.f32.xlu0 %v430
    %v432 = vpop.xlane.xlu0 %431
    %vm433 = vcmp.eq.f32.partialorder %v337, %v432
    %434 = vrot.lane.b32.xlu0 %v312, 64
    %v435 = vpop.permute.xlu0 %434
    %v436 = vsel %vm433, %v435, 32
    %v437 = vsel %vm429, %v436, 2147483647
    %v438 = vand.u32 %v437, 65535
    %v439 = vshra.s32 %v437, 16
    %v440 = vcvt.s32.f32 %v438
    %v441 = vcvt.s32.f32 %v439
    %442 = vmin.xlane.f32.xlu0 %v441
    %v443 = vpop.xlane.xlu0 %442
    %vm444 = vcmp.eq.f32.partialorder %v441, %v443
    %v445 = vsel %vm444, %v440, inf
    %446 = vmin.xlane.f32.xlu0 %v445
    %v447 = vpop.xlane.xlu0 %446
    %v448 = vcvt.f32.s32 %v447
    %v449 = vcvt.f32.s32 %v443
    %v450 = vshll.u32 %v449, 16
    %v451 = vadd.s32 %v450, %v448
    %v452 = vsub.f32 %v337, %v432
    %v453 = vmul.f32 %v452, 1.442695
    %v454 = vpow.pop %v453
    %456 = vrot.lane.b32.xlu0 %v454, 64
    %v457 = vpop.permute.xlu0 %456
    %v459 = vsel %vm90, %v457, 0.0
    %460 = vadd.xlane.f32.xlu0 %v459
    %v461 = vpop.xlane.xlu0 %460
    %v462 = vlog2.pop %v461
    %v463 = vmul.f32 %v462, 0.6931472
    %v464 = vadd.f32 %v432, %v463
    %v465 = vsub.f32 %v432, %v464
    %v466 = vadd.f32 %v415, %v465
    %v467 = vsub.f32 %v337, %v464
    %v468 = vmul.f32 %v454, %v467
    %470 = vrot.lane.b32.xlu0 %v468, 64
    %v471 = vpop.permute.xlu0 %470
    %v473 = vsel %vm90, %v471, 0.0
    %474 = vadd.xlane.f32.xlu0 %v473
    %v475 = vpop.xlane.xlu0 %474
    %v476 = vrcp.pop %v461
    %v477 = vmul.f32 %v475, %v476
    %v478 = vsub.f32 %v427, %v477
    %v479 = vcvt.s32.f32 %v451
    %vm480 = vcmask 1048320
    %v481 = vsel %vm480, %v337, -inf
    %482 = vmax.xlane.f32.xlu0 %v481
    %v483 = vpop.xlane.xlu0 %482
    %vm484 = vcmp.eq.f32.partialorder %v337, %v483
    %485 = vrot.lane.b32.xlu0 %v312, 96
    %v486 = vpop.permute.xlu0 %485
    %v487 = vsel %vm484, %v486, 32
    %v488 = vsel %vm480, %v487, 2147483647
    %v489 = vand.u32 %v488, 65535
    %v490 = vshra.s32 %v488, 16
    %v491 = vcvt.s32.f32 %v489
    %v492 = vcvt.s32.f32 %v490
    %493 = vmin.xlane.f32.xlu0 %v492
    %v494 = vpop.xlane.xlu0 %493
    %vm495 = vcmp.eq.f32.partialorder %v492, %v494
    %v496 = vsel %vm495, %v491, inf
    %497 = vmin.xlane.f32.xlu0 %v496
    %v498 = vpop.xlane.xlu0 %497
    %v499 = vcvt.f32.s32 %v498
    %v500 = vcvt.f32.s32 %v494
    %v501 = vshll.u32 %v500, 16
    %v502 = vadd.s32 %v501, %v499
    %v503 = vsub.f32 %v337, %v483
    %v504 = vmul.f32 %v503, 1.442695
    %v505 = vpow.pop %v504
    %507 = vrot.lane.b32.xlu0 %v505, 32
    %v508 = vpop.permute.xlu0 %507
    %v510 = vsel %vm90, %v508, 0.0
    %511 = vadd.xlane.f32.xlu0 %v510
    %v512 = vpop.xlane.xlu0 %511
    %v513 = vlog2.pop %v512
    %v514 = vmul.f32 %v513, 0.6931472
    %v515 = vadd.f32 %v483, %v514
    %v516 = vsub.f32 %v483, %v515
    %v517 = vadd.f32 %v466, %v516
    %v518 = vsub.f32 %v337, %v515
    %v519 = vmul.f32 %v505, %v518
    %521 = vrot.lane.b32.xlu0 %v519, 32
    %v522 = vpop.permute.xlu0 %521
    %v524 = vsel %vm90, %v522, 0.0
    %525 = vadd.xlane.f32.xlu0 %v524
    %v526 = vpop.xlane.xlu0 %525
    %v527 = vrcp.pop %v512
    %v528 = vmul.f32 %v526, %v527
    %v529 = vsub.f32 %v478, %v528
    %v530 = vcvt.s32.f32 %v502
    %vm531 = vcmask 7168
    %v532 = vsel %vm531, %v517, %v529
    %vm533 = vcmask 15360
    %v534 = vsel %vm533, %v532, %v377
    %vm535 = vcmask 23552
    %v536 = vsel %vm535, %v534, %v428
    %vm537 = vcmask 31744
    %v538 = vsel %vm537, %v536, %v479
    %vm539 = vcmask 39936
    %v540 = vsel %vm539, %v538, %v530
    %vm541 = vcmask 48128
    %v542 = vsel %vm541, %v540, 0.0
    %vm543 = vcmask 64512
    %544 = vst.msk [vmem:[#allocation8] sm:$0xff] %vm543, %v542
    // Predicated region
    $region38: #{tpu_custom_call.1} parent=1 // pred_check
      _
    $region39: #{tpu_custom_call.1} parent=1 // pred_check_branch
      %546 = sbr.rel (0) target = $region41
    $region40: #{tpu_custom_call.1} parent=1 // pred_region
      %s548 = ssub.s32 128, 128
      %549 = vsyncadd [#allocation4], %s548
      %s551 = sshll.u32 [#allocation8], 4
      %s552 = int_to_ptr.vmem [resolvable:$true] %s551
      %554 = dma.vmem_to_hbm [thread:$0]  %s552, 128, %s6, [#allocation4]
    $region41: #{tpu_custom_call.1} parent=1 // pred_fallthru
      _
    // Predicated region
    $region42: #{tpu_custom_call.1} parent=1 // pred_check
      _
    $region43: #{tpu_custom_call.1} parent=1 // pred_check_branch
      %556 = sbr.rel (0) target = $region45
    $region44: #{tpu_custom_call.1} parent=1 // pred_region
      %557 = dma.done [#allocation4], 128
    $region45: #{tpu_custom_call.1} parent=1 // pred_fallthru
      _
    %558 = vsyncpa [#allocation3], 1
    %559 = vsyncpa [#allocation6], 1
    %560 = vsyncpa [#allocation4], 1

</llo_original>
